<compile_context>
chip_gen: v5e
topology: v5e:2x2
jax: 0.10.0
libtpu: 0.0.40
codegen_flags: <defaults>
</compile_context>

<pallas_src>
import jax
import jax.numpy as jnp
from jax.experimental import pallas as pl
from jax.experimental.pallas import tpu as pltpu

_LANES = 128                      # output packing granularity (vreg lane width)
_VMEM_BUDGET = 48 * 1024 * 1024   # headroom under v7x's 64 MiB physical VMEM


def _round_up(n, m):
    return ((n + m - 1) // m) * m


def _mlp_kernel(x_ref, w1_ref, b1_ref, w2_ref, b2_ref, o_ref):
    rows, lanes = o_ref.shape                 # (TM // 128, 128)
    # Layer 1 on the MXU with f32 accumulation: [TM, F] @ [F, H] -> [TM, H].
    h = jnp.dot(x_ref[...], w1_ref[...], preferred_element_type=jnp.float32)
    # Bias + ReLU epilogue in f32 (VPU).  b1 is a resident [1, H] row.
    h = jnp.maximum(h + b1_ref[...].astype(jnp.float32), 0.0)
    # Layer 2 has output width 1 -> VPU multiply + lane reduction against the
    # pre-transposed w2 row instead of a 1-column MXU matmul.  Group 128 batch
    # rows per packed output row first (free reshape: splits the sublane axis
    # on a vreg-tile boundary); the cross-lane relayout lands on the idle XLU.
    h = h.reshape(rows, lanes, h.shape[-1])
    y = jnp.sum(h * w2_ref[...].astype(jnp.float32), axis=-1)     # [rows, 128]
    y = y + b2_ref[0, 0].astype(jnp.float32)                      # scalar (SMEM)
    # Packed lane-dense store: batch row m of this tile lands at
    # (m // 128, m % 128) -> ~128x less HBM writeback than a broadcast slab.
    o_ref[...] = y.astype(o_ref.dtype)


def discriminator_forward(x, w1, b1, w2, b2, *, block_m=1024):
    """y = relu(x @ w1 + b1) @ w2 + b2.

    x: [B, F]; w1: [F, H]; b1: [1, H]; w2: [H, 1]; b2: [1, 1] (weights stored
    pre-transposed as [in, out] relative to PyTorch's nn.Linear).  The kernel
    uses the dtypes it is given (pass bf16 x / w1 for the bandwidth win);
    accumulation, bias-add and ReLU are always f32.
    """
    B, F = x.shape
    H = w1.shape[1]
    out_dtype = x.dtype

    w2_row = w2.reshape(1, H)          # layer 2 as a lane reduction
    b2_s = b2.reshape(1, 1)            # scalar, lives in SMEM

    x_bytes = jnp.dtype(x.dtype).itemsize
    w_bytes = jnp.dtype(w1.dtype).itemsize
    o_bytes = jnp.dtype(out_dtype).itemsize

    def footprint(tm):
        # Upper bound: assume every stream is double-buffered by the pipeline.
        x_tile = tm * F * x_bytes
        out_tile = tm * o_bytes                    # packed (tm//128, 128) block
        resident = F * H * w_bytes + 2 * H * 4     # w1 + b1 + w2 row
        return 2 * (x_tile + out_tile + resident)

    # Batch tile sizing against the VMEM budget.
    bm = max(128, int(block_m))
    while bm > 1024 and footprint(bm) > _VMEM_BUDGET:
        bm -= 1024
    # TODO(synk): if F*H alone exceeds the VMEM budget (very large weights),
    # add an H-tiling 'arbitrary' grid axis with an f32 accumulator scratch
    # instead of keeping w1 fully resident.

    if B <= max(bm, 1024):
        # Single grid step: blocks equal the full (lane-padded) arrays.
        rows_total = _round_up(B, _LANES)
        if rows_total != B:                        # <= 127 rows of padding only
            x = jnp.pad(x, ((0, rows_total - B), (0, 0)))
        tm, grid_m = rows_total, 1
    else:
        tm = max(1024, (min(bm, B) // 1024) * 1024)
        if B >= 4 * 1024:                          # v7x: keep >= 4 grid steps
            tm = max(1024, min(tm, (B // 4096) * 1024))
        grid_m = pl.cdiv(B, tm)                    # ragged tail handled by Pallas
    out_rows = grid_m * (tm // _LANES)

    flops = 2 * B * F * H + 2 * B * H
    bytes_accessed = int(
        x.size * x_bytes + w1.size * w_bytes
        + b1.size * jnp.dtype(b1.dtype).itemsize
        + w2_row.size * jnp.dtype(w2_row.dtype).itemsize
        + b2_s.size * jnp.dtype(b2_s.dtype).itemsize
        + out_rows * _LANES * o_bytes)

    vmem_limit = int(min(max(footprint(tm) + (4 << 20), 32 << 20), 64 << 20))

    out = pl.pallas_call(
        _mlp_kernel,
        out_shape=jax.ShapeDtypeStruct((out_rows, _LANES), out_dtype),
        grid_spec=pltpu.PrefetchScalarGridSpec(
            num_scalar_prefetch=0,
            grid=(grid_m,),
            in_specs=[
                pl.BlockSpec((tm, F), lambda i: (i, 0)),    # x: tiled over batch
                pl.BlockSpec((F, H), lambda i: (0, 0)),     # w1: VMEM-resident
                pl.BlockSpec((1, H), lambda i: (0, 0)),     # b1: VMEM-resident
                pl.BlockSpec((1, H), lambda i: (0, 0)),     # w2 row: VMEM-resident
                pl.BlockSpec(memory_space=pltpu.MemorySpace.SMEM),  # b2 scalar
            ],
            out_specs=pl.BlockSpec((tm // _LANES, _LANES), lambda i: (i, 0)),
        ),
        compiler_params=pltpu.CompilerParams(
            dimension_semantics=("parallel",),
            vmem_limit_bytes=vmem_limit,
        ),
        cost_estimate=pl.CostEstimate(
            flops=flops, transcendentals=0, bytes_accessed=bytes_accessed),
    )(x, w1, b1, w2_row, b2_s)

    # Unpack: packed row r, lane l  <->  batch row r * 128 + l.
    return out.reshape(-1, 1)[:B]


def init_discriminator_params(key, in_feature, hidden_size, dtype=jnp.float32):
    """Deterministic init mirroring nn.Linear's U(-1/sqrt(fan_in), 1/sqrt(fan_in))."""
    k1, k2, k3, k4 = jax.random.split(key, 4)
    lim1 = 1.0 / (in_feature ** 0.5)
    lim2 = 1.0 / (hidden_size ** 0.5)
    # Stored as [in, out] (transposed from PyTorch's [out, in]).
    w1 = jax.random.uniform(k1, (in_feature, hidden_size), dtype, -lim1, lim1)
    b1 = jax.random.uniform(k2, (1, hidden_size), dtype, -lim1, lim1)
    w2 = jax.random.uniform(k3, (hidden_size, 1), dtype, -lim2, lim2)
    b2 = jax.random.uniform(k4, (1, 1), dtype, -lim2, lim2)
    return w1, b1, w2, b2


def _reference_forward(x, w1, b1, w2, b2):
    h = jnp.maximum(x @ w1 + b1, 0.0)
    return h @ w2 + b2


if __name__ == "__main__":
    key = jax.random.PRNGKey(0)
    kx1, kp1, kx2, kp2 = jax.random.split(key, 4)

    # --- small config matching GeneralMLP([in_feature, hidden_size, 1]) ---
    batch, in_feature, hidden_size = 8, 16, 32
    x = jax.random.normal(kx1, (batch, in_feature), jnp.float32)
    w1, b1, w2, b2 = init_discriminator_params(kp1, in_feature, hidden_size)
    y_ref = _reference_forward(x, w1, b1, w2, b2)

    y = discriminator_forward(x, w1, b1, w2, b2)
    jax.block_until_ready(y)
    assert y.shape == (batch, 1)
    assert jnp.allclose(y, y_ref, atol=1e-5, rtol=1e-5)

    # bf16 layer-1 path (x / w1 stored in bf16 upstream); looser tolerance.
    y_bf16 = discriminator_forward(
        x.astype(jnp.bfloat16), w1.astype(jnp.bfloat16), b1, w2, b2)
    jax.block_until_ready(y_bf16)
    assert y_bf16.shape == (batch, 1)
    assert jnp.allclose(y_bf16.astype(jnp.float32), y_ref, atol=1e-1, rtol=1e-1)

    # --- multi-step grid with a ragged last batch block + packed output ---
    batch2, in2, hid2 = 1300, 64, 96
    x2 = jax.random.normal(kx2, (batch2, in2), jnp.float32)
    p2 = init_discriminator_params(kp2, in2, hid2)
    y2_ref = _reference_forward(x2, *p2)
    y2 = discriminator_forward(x2, *p2)
    jax.block_until_ready(y2)
    assert y2.shape == (batch2, 1)
    assert jnp.allclose(y2, y2_ref, atol=1e-4, rtol=1e-4)

    print("KERNEL_OK")
</pallas_src>

<mosaic_0001>
module attributes {stable_mosaic.version = 11 : i64} {
  func.func @_mlp_kernel(%arg0: i32, %arg1: memref<128x16xf32, #tpu.memory_space<vmem>>, %arg2: memref<16x32xf32, #tpu.memory_space<vmem>>, %arg3: memref<1x32xf32, #tpu.memory_space<vmem>>, %arg4: memref<1x32xf32, #tpu.memory_space<vmem>>, %arg5: memref<1x1xf32, #tpu.memory_space<smem>>, %arg6: memref<1x128xf32, #tpu.memory_space<vmem>>) attributes {dimension_semantics = [#tpu.dimension_semantics<parallel>], iteration_bounds = array<i64: 1>, scalar_prefetch = 0 : i64, scratch_operands = 0 : i64, tpu.core_type = #tpu.core_type<tc>, window_params = [{transform_indices = @transform_0, window_bounds = array<i64: 128, 16>}, {pipeline_mode = #tpu.pipeline_mode<synchronous>, transform_indices = @transform_1, window_bounds = array<i64: 16, 32>}, {pipeline_mode = #tpu.pipeline_mode<synchronous>, transform_indices = @transform_2, window_bounds = array<i64: 1, 32>}, {pipeline_mode = #tpu.pipeline_mode<synchronous>, transform_indices = @transform_3, window_bounds = array<i64: 1, 32>}, {transform_indices = @transform_4, window_bounds = array<i64: 1, 1>}, {transform_indices = @transform_5, window_bounds = array<i64: 1, 128>}]} {
    %c0 = arith.constant 0 : index
    %c0_0 = arith.constant 0 : index
    %0 = vector.load %arg1[%c0, %c0_0] : memref<128x16xf32, #tpu.memory_space<vmem>>, vector<128x16xf32>
    %c0_1 = arith.constant 0 : index
    %c0_2 = arith.constant 0 : index
    %1 = vector.load %arg2[%c0_1, %c0_2] : memref<16x32xf32, #tpu.memory_space<vmem>>, vector<16x32xf32>
    %cst = arith.constant dense<0.000000e+00> : vector<128x32xf32>
    %2 = tpu.matmul %0, %1, %cst {dimension_numbers = #tpu.dot_dimension_numbers<[1], [0], [0], [1], [0, 0, 1, 1], [], []>} : vector<128x16xf32>, vector<16x32xf32>, vector<128x32xf32> -> vector<128x32xf32>
    %c0_3 = arith.constant 0 : index
    %c0_4 = arith.constant 0 : index
    %3 = vector.load %arg3[%c0_3, %c0_4] : memref<1x32xf32, #tpu.memory_space<vmem>>, vector<1x32xf32>
    %4 = vector.broadcast %3 : vector<1x32xf32> to vector<128x32xf32>
    %5 = arith.addf %2, %4 : vector<128x32xf32>
    %cst_5 = arith.constant 0.000000e+00 : f32
    %6 = vector.broadcast %cst_5 : f32 to vector<128x32xf32>
    %7 = arith.maximumf %5, %6 : vector<128x32xf32>
    %8 = vector.shape_cast %7 : vector<128x32xf32> to vector<1x128x32xf32>
    %c0_6 = arith.constant 0 : index
    %c0_7 = arith.constant 0 : index
    %9 = vector.load %arg4[%c0_6, %c0_7] : memref<1x32xf32, #tpu.memory_space<vmem>>, vector<1x32xf32>
    %10 = vector.shape_cast %9 : vector<1x32xf32> to vector<1x1x32xf32>
    %11 = vector.broadcast %10 : vector<1x1x32xf32> to vector<1x128x32xf32>
    %12 = arith.mulf %8, %11 : vector<1x128x32xf32>
    %cst_8 = arith.constant dense<0.000000e+00> : vector<1x128xf32>
    %13 = vector.multi_reduction <add>, %12, %cst_8 [2] : vector<1x128x32xf32> to vector<1x128xf32>
    %c0_9 = arith.constant 0 : index
    %c0_10 = arith.constant 0 : index
    %14 = memref.load %arg5[%c0_9, %c0_10] : memref<1x1xf32, #tpu.memory_space<smem>>
    %15 = vector.broadcast %14 : f32 to vector<1x128xf32>
    %16 = arith.addf %13, %15 : vector<1x128xf32>
    %c0_11 = arith.constant 0 : index
    %c0_12 = arith.constant 0 : index
    %17 = vector.load %arg6[%c0_11, %c0_12] : memref<1x128xf32, #tpu.memory_space<vmem>>, vector<1x128xf32>
    tpu.vector_store %arg6[%c0_11, %c0_12], %16 {strides = array<i32>} : memref<1x128xf32, #tpu.memory_space<vmem>>, vector<1x128xf32>,
    return
  }
  func.func @transform_0(%arg0: i32) -> (i32, i32) {
    %c0_i32 = arith.constant 0 : i32
    %c0_i32_0 = arith.constant 0 : i32
    return %arg0, %c0_i32 : i32, i32
  }
  func.func @transform_1(%arg0: i32) -> (i32, i32) {
    %c0_i32 = arith.constant 0 : i32
    %c0_i32_0 = arith.constant 0 : i32
    %c0_i32_1 = arith.constant 0 : i32
    return %c0_i32, %c0_i32_0 : i32, i32
  }
  func.func @transform_2(%arg0: i32) -> (i32, i32) {
    %c0_i32 = arith.constant 0 : i32
    %c0_i32_0 = arith.constant 0 : i32
    %c0_i32_1 = arith.constant 0 : i32
    return %c0_i32, %c0_i32_0 : i32, i32
  }
  func.func @transform_3(%arg0: i32) -> (i32, i32) {
    %c0_i32 = arith.constant 0 : i32
    %c0_i32_0 = arith.constant 0 : i32
    %c0_i32_1 = arith.constant 0 : i32
    return %c0_i32, %c0_i32_0 : i32, i32
  }
  func.func @transform_4(%arg0: i32) -> (i32, i32) {
    %c0_i32 = arith.constant 0 : i32
    %c0_i32_0 = arith.constant 0 : i32
    %c0_i32_1 = arith.constant 0 : i32
    return %c0_i32, %c0_i32_0 : i32, i32
  }
  func.func @transform_5(%arg0: i32) -> (i32, i32) {
    %c0_i32 = arith.constant 0 : i32
    %c0_i32_0 = arith.constant 0 : i32
    return %arg0, %c0_i32 : i32, i32
  }
}

</mosaic_0001>

<llo_original>
// kernel: tpu_custom_call.1
$region0: #{tpu_custom_call.1}
  #allocation0 [shape = 'u32[]', space=smem, size = 0x4, offset = 0x4, fixed_abs, tag = 'smem constant byte address 0x4 - core index']
  #allocation1 [shape = 'u32[72,128]{1,0:T(1,128)}', space=vmem, size = 0x9000, scoped, tag = 'internal scratch']
  #allocation2 [shape = 'f32[1,1]{1,0:T(1,128)S(6)}', space=smem, size = 0x200, scoped, tag = 'scoped memory for tpu_custom_call.1']
  %s0 = inlined_call_operand.vmem [shape: f32[128,16], index: 0, kind: input, shape index: {}]
  %s1 = inlined_call_operand.vmem [shape: f32[16,32], index: 1, kind: input, shape index: {}]
  %s2 = inlined_call_operand.vmem [shape: f32[1,32], index: 2, kind: input, shape index: {}]
  %s3 = inlined_call_operand.vmem [shape: f32[1,32], index: 3, kind: input, shape index: {}]
  %s4 = inlined_call_operand.<no memory space> [shape: f32[1,1], index: 4, kind: input, shape index: {}]
  %s5 = inlined_call_operand.hbm [shape: f32[1,128], index: 5, kind: output, shape index: {}]
  %s6 = sld [smem:[#allocation0]]
  $region30: #{tpu_custom_call.1} parent=0
    _
  %s8 = ssub.s32 1, %s6
  %s9 = scalar_select 0, %s8, %s6
  %10 = sst [smem:[#allocation2]] %s4
  $region1: #{tpu_custom_call.1} parent=0
    #allocation3 [shape = 'u8[512]{0}', space=vmem, size = 0x400, scoped, tag = 'output window, operand 0, single buffered']
    #allocation4 [shape = 's32[1]{0}', space=sflag, size = 0x4, scoped, tag = 'scoped memory for tpu_custom_call.1']
    %11 = vsyncpa [#allocation4], 0
    // Predicated region
    $region2: #{tpu_custom_call.1} parent=1 // pred_check
      _
    $region3: #{tpu_custom_call.1} parent=1 // pred_check_branch
      %13 = sbr.rel (0) target = $region5
    $region4: #{tpu_custom_call.1} parent=1 // pred_region
      _
    $region5: #{tpu_custom_call.1} parent=1 // pred_fallthru
      _
    // Predicated region
    $region6: #{tpu_custom_call.1} parent=1 // pred_check
      _
    $region7: #{tpu_custom_call.1} parent=1 // pred_check_branch
      %15 = sbr.rel (0) target = $region9
    $region8: #{tpu_custom_call.1} parent=1 // pred_region
      _
    $region9: #{tpu_custom_call.1} parent=1 // pred_fallthru
      _
    // Predicated region
    $region10: #{tpu_custom_call.1} parent=1 // pred_check
      _
    $region11: #{tpu_custom_call.1} parent=1 // pred_check_branch
      %17 = sbr.rel (0) target = $region13
    $region12: #{tpu_custom_call.1} parent=1 // pred_region
      _
    $region13: #{tpu_custom_call.1} parent=1 // pred_fallthru
      _
    // Predicated region
    $region14: #{tpu_custom_call.1} parent=1 // pred_check
      _
    $region15: #{tpu_custom_call.1} parent=1 // pred_check_branch
      %19 = sbr.rel (0) target = $region17
    $region16: #{tpu_custom_call.1} parent=1 // pred_region
      _
    $region17: #{tpu_custom_call.1} parent=1 // pred_fallthru
      _
    // Predicated region
    $region18: #{tpu_custom_call.1} parent=1 // pred_check
      _
    $region19: #{tpu_custom_call.1} parent=1 // pred_check_branch
      %21 = sbr.rel (0) target = $region21
    $region20: #{tpu_custom_call.1} parent=1 // pred_region
      _
    $region21: #{tpu_custom_call.1} parent=1 // pred_fallthru
      _
    %v22 = vld [vmem:[%s0] sm:$0xff]
    %v23 = vld [vmem:[%s0 + $0x8] sm:$0xff]
    %v24 = vld [vmem:[%s0 + $0x10] sm:$0xff]
    %v25 = vld [vmem:[%s0 + $0x18] sm:$0xff]
    %v26 = vld [vmem:[%s0 + $0x20] sm:$0xff]
    %v27 = vld [vmem:[%s0 + $0x28] sm:$0xff]
    %v28 = vld [vmem:[%s0 + $0x30] sm:$0xff]
    %v29 = vld [vmem:[%s0 + $0x38] sm:$0xff]
    %v30 = vld [vmem:[%s0 + $0x40] sm:$0xff]
    %v31 = vld [vmem:[%s0 + $0x48] sm:$0xff]
    %v32 = vld [vmem:[%s0 + $0x50] sm:$0xff]
    %v33 = vld [vmem:[%s0 + $0x58] sm:$0xff]
    %v34 = vld [vmem:[%s0 + $0x60] sm:$0xff]
    %v35 = vld [vmem:[%s0 + $0x68] sm:$0xff]
    %v36 = vld [vmem:[%s0 + $0x70] sm:$0xff]
    %v37 = vld [vmem:[%s0 + $0x78] sm:$0xff]
    %v38 = vld [vmem:[%s1] sm:$0xff]
    %v39 = vld [vmem:[%s1 + $0x8] sm:$0xff]
    %v40 = vld [vmem:[%s2] sm:$0x1]
    %v42 = vperm.slane %v40, 0
    %vm44 = vcmask 130048
    %v46 = vsel %vm44, %v22, 0
    %v49 = vsel %vm44, %v23, 0
    %v52 = vsel %vm44, %v24, 0
    %v55 = vsel %vm44, %v25, 0
    %v58 = vsel %vm44, %v26, 0
    %v61 = vsel %vm44, %v27, 0
    %v64 = vsel %vm44, %v28, 0
    %v67 = vsel %vm44, %v29, 0
    %v70 = vsel %vm44, %v30, 0
    %v73 = vsel %vm44, %v31, 0
    %v76 = vsel %vm44, %v32, 0
    %v79 = vsel %vm44, %v33, 0
    %v82 = vsel %vm44, %v34, 0
    %v85 = vsel %vm44, %v35, 0
    %v88 = vsel %vm44, %v36, 0
    %v91 = vsel %vm44, %v37, 0
    %93 = vmatpush.msra.mxu0 0.0
    %94 = vmatpush.msra.mxu0 0.0
    %95 = vmatpush.msra.mxu0 0.0
    %96 = vmatpush.msra.mxu0 0.0
    %97 = vmatpush.msra.mxu0 0.0
    %98 = vmatpush.msra.mxu0 0.0
    %99 = vmatpush.msra.mxu0 0.0
    %100 = vmatpush.msra.mxu0 0.0
    %101 = vmatpush.msra.mxu0 0.0
    %102 = vmatpush.msra.mxu0 0.0
    %103 = vmatpush.msra.mxu0 0.0
    %104 = vmatpush.msra.mxu0 0.0
    %105 = vmatpush.msra.mxu0 0.0
    %106 = vmatpush.msra.mxu0 0.0
    %107 = vmatpush.msra.mxu0 %v39
    %108 = vmatpush.msra.mxu0 %v38
    %109 = vmatmul.f32.gmra.mxu0 %v46
    %v110 = vpop.f32.mrf.mxu0
    %v111 = vadd.f32 %v42, %v110
    %112 = vmatmul.f32.gmra.mxu0 %v49
    %v113 = vpop.f32.mrf.mxu0
    %v114 = vadd.f32 %v42, %v113
    %115 = vmatmul.f32.gmra.mxu0 %v52
    %v116 = vpop.f32.mrf.mxu0
    %v117 = vadd.f32 %v42, %v116
    %118 = vmatmul.f32.gmra.mxu0 %v55
    %v119 = vpop.f32.mrf.mxu0
    %v120 = vadd.f32 %v42, %v119
    %121 = vmatmul.f32.gmra.mxu0 %v58
    %v122 = vpop.f32.mrf.mxu0
    %v123 = vadd.f32 %v42, %v122
    %124 = vmatmul.f32.gmra.mxu0 %v61
    %v125 = vpop.f32.mrf.mxu0
    %v126 = vadd.f32 %v42, %v125
    %127 = vmatmul.f32.gmra.mxu0 %v64
    %v128 = vpop.f32.mrf.mxu0
    %v129 = vadd.f32 %v42, %v128
    %130 = vmatmul.f32.gmra.mxu0 %v67
    %v131 = vpop.f32.mrf.mxu0
    %v132 = vadd.f32 %v42, %v131
    %133 = vmatmul.f32.gmra.mxu0 %v70
    %v134 = vpop.f32.mrf.mxu0
    %v135 = vadd.f32 %v42, %v134
    %136 = vmatmul.f32.gmra.mxu0 %v73
    %v137 = vpop.f32.mrf.mxu0
    %v138 = vadd.f32 %v42, %v137
    %139 = vmatmul.f32.gmra.mxu0 %v76
    %v140 = vpop.f32.mrf.mxu0
    %v141 = vadd.f32 %v42, %v140
    %142 = vmatmul.f32.gmra.mxu0 %v79
    %v143 = vpop.f32.mrf.mxu0
    %v144 = vadd.f32 %v42, %v143
    %145 = vmatmul.f32.gmra.mxu0 %v82
    %v146 = vpop.f32.mrf.mxu0
    %v147 = vadd.f32 %v42, %v146
    %148 = vmatmul.f32.gmra.mxu0 %v85
    %v149 = vpop.f32.mrf.mxu0
    %v150 = vadd.f32 %v42, %v149
    %151 = vmatmul.f32.gmra.mxu0 %v88
    %v152 = vpop.f32.mrf.mxu0
    %v153 = vadd.f32 %v42, %v152
    %154 = vmatmul.f32.gmra.mxu0 %v91
    %v155 = vpop.f32.mrf.mxu0
    %v156 = vadd.f32 %v42, %v155
    %157 = vdwg.mxu0
    %v158 = vmax.f32 %v111, 0.0
    %v159 = vmax.f32 %v114, 0.0
    %v160 = vmax.f32 %v117, 0.0
    %v161 = vmax.f32 %v120, 0.0
    %v162 = vmax.f32 %v123, 0.0
    %v163 = vmax.f32 %v126, 0.0
    %v164 = vmax.f32 %v129, 0.0
    %v165 = vmax.f32 %v132, 0.0
    %v166 = vmax.f32 %v135, 0.0
    %v167 = vmax.f32 %v138, 0.0
    %v168 = vmax.f32 %v141, 0.0
    %v169 = vmax.f32 %v144, 0.0
    %v170 = vmax.f32 %v147, 0.0
    %v171 = vmax.f32 %v150, 0.0
    %v172 = vmax.f32 %v153, 0.0
    %v173 = vmax.f32 %v156, 0.0
    %v174 = vld [vmem:[%s3] sm:$0x1]
    %v176 = vperm.slane %v174, 0
    %v178 = vmul.f32 %v158, %v176
    %v179 = vmul.f32 %v159, %v176
    %v180 = vmul.f32 %v160, %v176
    %v181 = vmul.f32 %v161, %v176
    %v182 = vmul.f32 %v162, %v176
    %v183 = vmul.f32 %v163, %v176
    %v184 = vmul.f32 %v164, %v176
    %v185 = vmul.f32 %v165, %v176
    %v186 = vmul.f32 %v166, %v176
    %v187 = vmul.f32 %v167, %v176
    %v188 = vmul.f32 %v168, %v176
    %v189 = vmul.f32 %v169, %v176
    %v190 = vmul.f32 %v170, %v176
    %v191 = vmul.f32 %v171, %v176
    %v192 = vmul.f32 %v172, %v176
    %v193 = vmul.f32 %v173, %v176
    %vm194 = vcmask 261120
    %v195 = vsel %vm194, %v178, 0.0
    %196 = vadd.xlane.f32.xlu0 %v195
    %v197 = vpop.xlane.xlu0 %196
    %v198 = vsel %vm194, %v179, 0.0
    %199 = vadd.xlane.f32.xlu0 %v198
    %v200 = vpop.xlane.xlu0 %199
    %v201 = vsel %vm194, %v180, 0.0
    %202 = vadd.xlane.f32.xlu0 %v201
    %v203 = vpop.xlane.xlu0 %202
    %v204 = vsel %vm194, %v181, 0.0
    %205 = vadd.xlane.f32.xlu0 %v204
    %v206 = vpop.xlane.xlu0 %205
    %v207 = vsel %vm194, %v182, 0.0
    %208 = vadd.xlane.f32.xlu0 %v207
    %v209 = vpop.xlane.xlu0 %208
    %v210 = vsel %vm194, %v183, 0.0
    %211 = vadd.xlane.f32.xlu0 %v210
    %v212 = vpop.xlane.xlu0 %211
    %v213 = vsel %vm194, %v184, 0.0
    %214 = vadd.xlane.f32.xlu0 %v213
    %v215 = vpop.xlane.xlu0 %214
    %v216 = vsel %vm194, %v185, 0.0
    %217 = vadd.xlane.f32.xlu0 %v216
    %v218 = vpop.xlane.xlu0 %217
    %v219 = vsel %vm194, %v186, 0.0
    %220 = vadd.xlane.f32.xlu0 %v219
    %v221 = vpop.xlane.xlu0 %220
    %v222 = vsel %vm194, %v187, 0.0
    %223 = vadd.xlane.f32.xlu0 %v222
    %v224 = vpop.xlane.xlu0 %223
    %v225 = vsel %vm194, %v188, 0.0
    %226 = vadd.xlane.f32.xlu0 %v225
    %v227 = vpop.xlane.xlu0 %226
    %v228 = vsel %vm194, %v189, 0.0
    %229 = vadd.xlane.f32.xlu0 %v228
    %v230 = vpop.xlane.xlu0 %229
    %v231 = vsel %vm194, %v190, 0.0
    %232 = vadd.xlane.f32.xlu0 %v231
    %v233 = vpop.xlane.xlu0 %232
    %v234 = vsel %vm194, %v191, 0.0
    %235 = vadd.xlane.f32.xlu0 %v234
    %v236 = vpop.xlane.xlu0 %235
    %v237 = vsel %vm194, %v192, 0.0
    %238 = vadd.xlane.f32.xlu0 %v237
    %v239 = vpop.xlane.xlu0 %238
    %v240 = vsel %vm194, %v193, 0.0
    %241 = vadd.xlane.f32.xlu0 %v240
    %v242 = vpop.xlane.xlu0 %241
    %s243 = sld [smem:[#allocation2]]
    %v244 = vstv %s243
    %v245 = vadd.f32 %v197, %v244
    %v246 = vadd.f32 %v200, %v244
    %v247 = vadd.f32 %v203, %v244
    %v248 = vadd.f32 %v206, %v244
    %v249 = vadd.f32 %v209, %v244
    %v250 = vadd.f32 %v212, %v244
    %v251 = vadd.f32 %v215, %v244
    %v252 = vadd.f32 %v218, %v244
    %v253 = vadd.f32 %v221, %v244
    %v254 = vadd.f32 %v224, %v244
    %v255 = vadd.f32 %v227, %v244
    %v256 = vadd.f32 %v230, %v244
    %v257 = vadd.f32 %v233, %v244
    %v258 = vadd.f32 %v236, %v244
    %v259 = vadd.f32 %v239, %v244
    %v260 = vadd.f32 %v242, %v244
    %v277 = vlaneseq
    %v278 = vand.u32 %v277, 127
    %v279 = vperm.slane %v245, %v278
    %v280 = vadd.s32 %v278, 4294967288
    %v281 = vperm.slane %v246, %v280
    %vm282 = vcmask 130112
    %v283 = vsel %vm282, %v281, %v279
    %v284 = vadd.s32 %v278, 4294967280
    %v285 = vperm.slane %v247, %v284
    %vm286 = vcmask 195712
    %v287 = vsel %vm286, %v285, %v283
    %v288 = vadd.s32 %v278, 4294967272
    %v289 = vperm.slane %v248, %v288
    %vm290 = vcmask 261312
    %v291 = vsel %vm290, %v289, %v287
    %v292 = vadd.s32 %v278, 4294967264
    %v293 = vperm.slane %v249, %v292
    %vm294 = vcmask 326912
    %v295 = vsel %vm294, %v293, %v291
    %v296 = vadd.s32 %v278, 4294967256
    %v297 = vperm.slane %v250, %v296
    %vm298 = vcmask 392512
    %v299 = vsel %vm298, %v297, %v295
    %v300 = vadd.s32 %v278, 4294967248
    %v301 = vperm.slane %v251, %v300
    %vm302 = vcmask 458112
    %v303 = vsel %vm302, %v301, %v299
    %v304 = vadd.s32 %v278, 4294967240
    %v305 = vperm.slane %v252, %v304
    %vm306 = vcmask 523712
    %v307 = vsel %vm306, %v305, %v303
    %v308 = vadd.s32 %v278, 4294967232
    %v309 = vperm.slane %v253, %v308
    %vm310 = vcmask 589312
    %v311 = vsel %vm310, %v309, %v307
    %v312 = vadd.s32 %v278, 4294967224
    %v313 = vperm.slane %v254, %v312
    %vm314 = vcmask 654912
    %v315 = vsel %vm314, %v313, %v311
    %v316 = vadd.s32 %v278, 4294967216
    %v317 = vperm.slane %v255, %v316
    %vm318 = vcmask 720512
    %v319 = vsel %vm318, %v317, %v315
    %v320 = vadd.s32 %v278, 4294967208
    %v321 = vperm.slane %v256, %v320
    %vm322 = vcmask 786112
    %v323 = vsel %vm322, %v321, %v319
    %v324 = vadd.s32 %v278, 4294967200
    %v325 = vperm.slane %v257, %v324
    %vm326 = vcmask 851712
    %v327 = vsel %vm326, %v325, %v323
    %v328 = vadd.s32 %v278, 4294967192
    %v329 = vperm.slane %v258, %v328
    %vm330 = vcmask 917312
    %v331 = vsel %vm330, %v329, %v327
    %v332 = vadd.s32 %v278, 4294967184
    %v333 = vperm.slane %v259, %v332
    %vm334 = vcmask 982912
    %v335 = vsel %vm334, %v333, %v331
    %v336 = vadd.s32 %v278, 4294967176
    %v337 = vperm.slane %v260, %v336
    %vm338 = vcmask 1048512
    %v339 = vsel %vm338, %v337, %v335
    %341 = vst [vmem:[#allocation3] sm:$0x1] %v339
    // Predicated region
    $region22: #{tpu_custom_call.1} parent=1 // pred_check
      _
    $region23: #{tpu_custom_call.1} parent=1 // pred_check_branch
      %343 = sbr.rel (0) target = $region25
    $region24: #{tpu_custom_call.1} parent=1 // pred_region
      %345 = vsyncadd [#allocation4], 0
      %s347 = sshll.u32 [#allocation3], 4
      %s348 = int_to_ptr.vmem [resolvable:$true] %s347
      %s349 = sshll.u32 %s5, 4
      %s350 = int_to_ptr.hbm [resolvable:$true] %s349
      %352 = dma.vmem_to_hbm [thread:$0]  %s348, 16, %s350, [#allocation4]
    $region25: #{tpu_custom_call.1} parent=1 // pred_fallthru
      _
    // Predicated region
    $region26: #{tpu_custom_call.1} parent=1 // pred_check
      _
    $region27: #{tpu_custom_call.1} parent=1 // pred_check_branch
      %354 = sbr.rel (0) target = $region29
    $region28: #{tpu_custom_call.1} parent=1 // pred_region
      %356 = dma.done [#allocation4], 16
    $region29: #{tpu_custom_call.1} parent=1 // pred_fallthru
      _
    %357 = vsyncpa [#allocation4], 1

</llo_original>
